<compile_context>
chip_gen: v5e
topology: v5e:2x2
jax: 0.10.0
libtpu: 0.0.40
codegen_flags: <defaults>
</compile_context>

<pallas_src>
import functools

import jax
import jax.numpy as jnp
from jax.experimental import pallas as pl
from jax.experimental.pallas import tpu as pltpu

HID = 64  # hidden width of the two inner Linear layers


def _round_up(n, m):
    return ((n + m - 1) // m) * m


def _swish(h, beta):
    # x * sigmoid(beta * x).  exp() and the approximate reciprocal both run on
    # the EUP (its own VLIW slot), so the elementwise tail stays off the VALU.
    return h * pl.reciprocal(1.0 + jnp.exp(-beta * h), approx=True)


def sxrnet_kernel(beta_ref,            # SMEM (3,) f32  : learned Swish betas
                  x_ref,               # VMEM (TB, Din)
                  w1_ref, b1_ref,      # VMEM (Din, 64), (1, 64)
                  w2_ref, b2_ref,      # VMEM (64, 64),  (1, 64)
                  w3_ref, b3_ref,      # VMEM (64, Dout), (1, Dout)
                  o_ref):              # VMEM (TB, Dout)
    x = x_ref[...]

    h1 = jnp.dot(x, w1_ref[...], preferred_element_type=jnp.float32) + b1_ref[...]
    h1 = _swish(h1, beta_ref[0])

    h2 = jnp.dot(h1, w2_ref[...], preferred_element_type=jnp.float32) + b2_ref[...]
    h2 = _swish(h2, beta_ref[1])

    h3 = jnp.dot(h2, w3_ref[...], preferred_element_type=jnp.float32) + b3_ref[...]
    o_ref[...] = _swish(h3, beta_ref[2]).astype(o_ref.dtype)


def _choose_batch_tile(batch, batch_tile):
    """Pick an 8-aligned batch tile <= batch_tile.

    Prefers >= 2 grid steps when the batch allows it so the parallel grid axis
    can be sharded across both TensorCores on v7x.
    """
    b_pad8 = _round_up(batch, 8)
    tile = min(_round_up(batch_tile, 8), b_pad8)
    if b_pad8 > 8 and pl.cdiv(b_pad8, tile) < 2:
        tile = _round_up(pl.cdiv(b_pad8, 2), 8)
    return tile


@functools.partial(jax.jit, static_argnames=("output_size", "batch_tile"))
def sxrnet_linear2(x, params, *, output_size, batch_tile=1024):
    """x: [B, input_size] float32 -> [B, 1, output_size, output_size]."""
    B, input_size = x.shape
    dout = output_size * output_size

    w1, b1, w2, b2, w3, b3, betas = params
    b1 = b1.reshape(1, -1)
    b2 = b2.reshape(1, -1)
    b3 = b3.reshape(1, -1)

    tile = _choose_batch_tile(B, batch_tile)
    b_pad = _round_up(B, tile)
    if b_pad != B:
        x = jnp.pad(x, ((0, b_pad - B), (0, 0)))  # padded rows sliced off below

    grid = (b_pad // tile,)
    bcast = lambda i: (0, 0)

    # VMEM budget: double-buffered x/out blocks + f32 intermediates + resident
    # weights, with 2x headroom; capped at 48 MiB (fits v7x's 64 MiB per TC).
    block_bytes = 4 * tile * (input_size + dout)            # one x + one out buffer
    inter_bytes = 4 * tile * (HID + HID + dout)             # h1, h2, h3
    weight_bytes = 4 * (input_size * HID + HID * HID + HID * dout
                        + 2 * HID + dout)
    vmem_limit = int(min(max(2 * (2 * block_bytes + inter_bytes + weight_bytes),
                             8 << 20),
                         48 << 20))

    flat = pl.pallas_call(
        sxrnet_kernel,
        out_shape=jax.ShapeDtypeStruct((b_pad, dout), jnp.float32),
        grid=grid,
        in_specs=[
            pl.BlockSpec(memory_space=pltpu.MemorySpace.SMEM),       # betas
            pl.BlockSpec((tile, input_size), lambda i: (i, 0)),      # x
            # Weights/biases: constant block index -> DMA'd once, held resident.
            pl.BlockSpec(w1.shape, bcast),
            pl.BlockSpec(b1.shape, bcast),
            pl.BlockSpec(w2.shape, bcast),
            pl.BlockSpec(b2.shape, bcast),
            pl.BlockSpec(w3.shape, bcast),
            pl.BlockSpec(b3.shape, bcast),
        ],
        out_specs=pl.BlockSpec((tile, dout), lambda i: (i, 0)),
        compiler_params=pltpu.CompilerParams(
            dimension_semantics=("parallel",),
            vmem_limit_bytes=vmem_limit),
    )(betas, x, w1, b1, w2, b2, w3, b3)

    # Matches torch Reshape(-1, 1, output_size, output_size)  (NCHW)
    return flat[:B].reshape(B, 1, output_size, output_size)


def init_params(key, input_size, output_size):
    """Deterministic init mimicking torch.nn.Linear default (U[-1/sqrt(fan_in), +])."""
    dout = output_size * output_size
    ks = jax.random.split(key, 6)

    def linear(kw, kb, fan_in, fan_out):
        bound = 1.0 / jnp.sqrt(jnp.float32(fan_in))
        w = jax.random.uniform(kw, (fan_in, fan_out), jnp.float32, -bound, bound)
        b = jax.random.uniform(kb, (fan_out,), jnp.float32, -bound, bound)
        return w, b

    w1, b1 = linear(ks[0], ks[1], input_size, HID)
    w2, b2 = linear(ks[2], ks[3], HID, HID)
    w3, b3 = linear(ks[4], ks[5], HID, dout)
    betas = jnp.ones((3,), jnp.float32)   # Swish beta init = 1.0
    return (w1, b1, w2, b2, w3, b3, betas)


def reference(x, params, output_size):
    w1, b1, w2, b2, w3, b3, betas = params
    h = x @ w1 + b1
    h = h * jax.nn.sigmoid(betas[0] * h)
    h = h @ w2 + b2
    h = h * jax.nn.sigmoid(betas[1] * h)
    h = h @ w3 + b3
    h = h * jax.nn.sigmoid(betas[2] * h)
    return h.reshape(-1, 1, output_size, output_size)


if __name__ == "__main__":
    input_size = 32
    output_size = 16

    key = jax.random.PRNGKey(0)
    kx, kp, kx2 = jax.random.split(key, 3)
    params = init_params(kp, input_size, output_size)

    # Tolerance is loosened vs. the exact-sigmoid reference because the kernel
    # uses the EUP approximate reciprocal inside Swish (and f32 MXU matmuls
    # decompose to bf16 passes).
    ATOL = RTOL = 1e-2

    # Case 1: tile-aligned batch.
    batch = 16
    x = jax.random.normal(kx, (batch, input_size), jnp.float32)
    out = jax.block_until_ready(sxrnet_linear2(x, params, output_size=output_size))
    ref = reference(x, params, output_size)
    assert out.shape == (batch, 1, output_size, output_size), out.shape
    assert jnp.allclose(out, ref, atol=ATOL, rtol=RTOL), float(jnp.abs(out - ref).max())

    # Case 2: ragged batch (exercises the padding path removed-assert used to reject).
    batch2 = 10
    x2 = jax.random.normal(kx2, (batch2, input_size), jnp.float32)
    out2 = jax.block_until_ready(sxrnet_linear2(x2, params, output_size=output_size))
    ref2 = reference(x2, params, output_size)
    assert out2.shape == (batch2, 1, output_size, output_size), out2.shape
    assert jnp.allclose(out2, ref2, atol=ATOL, rtol=RTOL), float(jnp.abs(out2 - ref2).max())

    print("KERNEL_OK")
</pallas_src>

<mosaic_0001>
module attributes {stable_mosaic.version = 11 : i64} {
  func.func @sxrnet_kernel(%arg0: i32, %arg1: memref<3xf32, #tpu.memory_space<smem>>, %arg2: memref<8x32xf32, #tpu.memory_space<vmem>>, %arg3: memref<32x64xf32, #tpu.memory_space<vmem>>, %arg4: memref<1x64xf32, #tpu.memory_space<vmem>>, %arg5: memref<64x64xf32, #tpu.memory_space<vmem>>, %arg6: memref<1x64xf32, #tpu.memory_space<vmem>>, %arg7: memref<64x256xf32, #tpu.memory_space<vmem>>, %arg8: memref<1x256xf32, #tpu.memory_space<vmem>>, %arg9: memref<8x256xf32, #tpu.memory_space<vmem>>) attributes {dimension_semantics = [#tpu.dimension_semantics<parallel>], iteration_bounds = array<i64: 2>, scalar_prefetch = 0 : i64, scratch_operands = 0 : i64, tpu.core_type = #tpu.core_type<tc>, window_params = [{transform_indices = @transform_0, window_bounds = array<i64: 3>}, {transform_indices = @transform_1, window_bounds = array<i64: 8, 32>}, {pipeline_mode = #tpu.pipeline_mode<synchronous>, transform_indices = @transform_2, window_bounds = array<i64: 32, 64>}, {pipeline_mode = #tpu.pipeline_mode<synchronous>, transform_indices = @transform_3, window_bounds = array<i64: 1, 64>}, {pipeline_mode = #tpu.pipeline_mode<synchronous>, transform_indices = @transform_4, window_bounds = array<i64: 64, 64>}, {pipeline_mode = #tpu.pipeline_mode<synchronous>, transform_indices = @transform_5, window_bounds = array<i64: 1, 64>}, {pipeline_mode = #tpu.pipeline_mode<synchronous>, transform_indices = @transform_6, window_bounds = array<i64: 64, 256>}, {pipeline_mode = #tpu.pipeline_mode<synchronous>, transform_indices = @transform_7, window_bounds = array<i64: 1, 256>}, {transform_indices = @transform_8, window_bounds = array<i64: 8, 256>}]} {
    %c0 = arith.constant 0 : index
    %c0_0 = arith.constant 0 : index
    %0 = vector.load %arg2[%c0, %c0_0] : memref<8x32xf32, #tpu.memory_space<vmem>>, vector<8x32xf32>
    %c0_1 = arith.constant 0 : index
    %c0_2 = arith.constant 0 : index
    %1 = vector.load %arg3[%c0_1, %c0_2] : memref<32x64xf32, #tpu.memory_space<vmem>>, vector<32x64xf32>
    %cst = arith.constant dense<0.000000e+00> : vector<8x64xf32>
    %2 = tpu.matmul %0, %1, %cst {dimension_numbers = #tpu.dot_dimension_numbers<[1], [0], [0], [1], [0, 0, 1, 1], [], []>} : vector<8x32xf32>, vector<32x64xf32>, vector<8x64xf32> -> vector<8x64xf32>
    %c0_3 = arith.constant 0 : index
    %c0_4 = arith.constant 0 : index
    %3 = vector.load %arg4[%c0_3, %c0_4] : memref<1x64xf32, #tpu.memory_space<vmem>>, vector<1x64xf32>
    %4 = vector.broadcast %3 : vector<1x64xf32> to vector<8x64xf32>
    %5 = arith.addf %2, %4 : vector<8x64xf32>
    %c0_5 = arith.constant 0 : index
    %6 = memref.load %arg1[%c0_5] : memref<3xf32, #tpu.memory_space<smem>>
    %cst_6 = arith.constant 0.000000e+00 : f32
    %7 = arith.subf %cst_6, %6 : f32
    %8 = vector.broadcast %7 : f32 to vector<8x64xf32>
    %9 = arith.mulf %8, %5 : vector<8x64xf32>
    %10 = math.exp %9 : vector<8x64xf32>
    %cst_7 = arith.constant 1.000000e+00 : f32
    %11 = vector.broadcast %cst_7 : f32 to vector<8x64xf32>
    %12 = arith.addf %11, %10 : vector<8x64xf32>
    %13 = tpu.reciprocal %12 {approx = true} : vector<8x64xf32> -> vector<8x64xf32>
    %14 = arith.mulf %5, %13 : vector<8x64xf32>
    %c0_8 = arith.constant 0 : index
    %c0_9 = arith.constant 0 : index
    %15 = vector.load %arg5[%c0_8, %c0_9] : memref<64x64xf32, #tpu.memory_space<vmem>>, vector<64x64xf32>
    %cst_10 = arith.constant dense<0.000000e+00> : vector<8x64xf32>
    %16 = tpu.matmul %14, %15, %cst_10 {dimension_numbers = #tpu.dot_dimension_numbers<[1], [0], [0], [1], [0, 0, 1, 1], [], []>} : vector<8x64xf32>, vector<64x64xf32>, vector<8x64xf32> -> vector<8x64xf32>
    %c0_11 = arith.constant 0 : index
    %c0_12 = arith.constant 0 : index
    %17 = vector.load %arg6[%c0_11, %c0_12] : memref<1x64xf32, #tpu.memory_space<vmem>>, vector<1x64xf32>
    %18 = vector.broadcast %17 : vector<1x64xf32> to vector<8x64xf32>
    %19 = arith.addf %16, %18 : vector<8x64xf32>
    %c1 = arith.constant 1 : index
    %20 = memref.load %arg1[%c1] : memref<3xf32, #tpu.memory_space<smem>>
    %cst_13 = arith.constant 0.000000e+00 : f32
    %21 = arith.subf %cst_13, %20 : f32
    %22 = vector.broadcast %21 : f32 to vector<8x64xf32>
    %23 = arith.mulf %22, %19 : vector<8x64xf32>
    %24 = math.exp %23 : vector<8x64xf32>
    %cst_14 = arith.constant 1.000000e+00 : f32
    %25 = vector.broadcast %cst_14 : f32 to vector<8x64xf32>
    %26 = arith.addf %25, %24 : vector<8x64xf32>
    %27 = tpu.reciprocal %26 {approx = true} : vector<8x64xf32> -> vector<8x64xf32>
    %28 = arith.mulf %19, %27 : vector<8x64xf32>
    %c0_15 = arith.constant 0 : index
    %c0_16 = arith.constant 0 : index
    %29 = vector.load %arg7[%c0_15, %c0_16] : memref<64x256xf32, #tpu.memory_space<vmem>>, vector<64x256xf32>
    %cst_17 = arith.constant dense<0.000000e+00> : vector<8x256xf32>
    %30 = tpu.matmul %28, %29, %cst_17 {dimension_numbers = #tpu.dot_dimension_numbers<[1], [0], [0], [1], [0, 0, 1, 1], [], []>} : vector<8x64xf32>, vector<64x256xf32>, vector<8x256xf32> -> vector<8x256xf32>
    %c0_18 = arith.constant 0 : index
    %c0_19 = arith.constant 0 : index
    %31 = vector.load %arg8[%c0_18, %c0_19] : memref<1x256xf32, #tpu.memory_space<vmem>>, vector<1x256xf32>
    %32 = vector.broadcast %31 : vector<1x256xf32> to vector<8x256xf32>
    %33 = arith.addf %30, %32 : vector<8x256xf32>
    %c2 = arith.constant 2 : index
    %34 = memref.load %arg1[%c2] : memref<3xf32, #tpu.memory_space<smem>>
    %cst_20 = arith.constant 0.000000e+00 : f32
    %35 = arith.subf %cst_20, %34 : f32
    %36 = vector.broadcast %35 : f32 to vector<8x256xf32>
    %37 = arith.mulf %36, %33 : vector<8x256xf32>
    %38 = math.exp %37 : vector<8x256xf32>
    %cst_21 = arith.constant 1.000000e+00 : f32
    %39 = vector.broadcast %cst_21 : f32 to vector<8x256xf32>
    %40 = arith.addf %39, %38 : vector<8x256xf32>
    %41 = tpu.reciprocal %40 {approx = true} : vector<8x256xf32> -> vector<8x256xf32>
    %42 = arith.mulf %33, %41 : vector<8x256xf32>
    %c0_22 = arith.constant 0 : index
    %c0_23 = arith.constant 0 : index
    %43 = vector.load %arg9[%c0_22, %c0_23] : memref<8x256xf32, #tpu.memory_space<vmem>>, vector<8x256xf32>
    tpu.vector_store %arg9[%c0_22, %c0_23], %42 {strides = array<i32>} : memref<8x256xf32, #tpu.memory_space<vmem>>, vector<8x256xf32>,
    return
  }
  func.func @transform_0(%arg0: i32) -> i32 {
    %c0_i32 = arith.constant 0 : i32
    %c0_i32_0 = arith.constant 0 : i32
    return %c0_i32 : i32
  }
  func.func @transform_1(%arg0: i32) -> (i32, i32) {
    %c0_i32 = arith.constant 0 : i32
    %c0_i32_0 = arith.constant 0 : i32
    return %arg0, %c0_i32 : i32, i32
  }
  func.func @transform_2(%arg0: i32) -> (i32, i32) {
    %c0_i32 = arith.constant 0 : i32
    %c0_i32_0 = arith.constant 0 : i32
    %c0_i32_1 = arith.constant 0 : i32
    return %c0_i32, %c0_i32_0 : i32, i32
  }
  func.func @transform_3(%arg0: i32) -> (i32, i32) {
    %c0_i32 = arith.constant 0 : i32
    %c0_i32_0 = arith.constant 0 : i32
    %c0_i32_1 = arith.constant 0 : i32
    return %c0_i32, %c0_i32_0 : i32, i32
  }
  func.func @transform_4(%arg0: i32) -> (i32, i32) {
    %c0_i32 = arith.constant 0 : i32
    %c0_i32_0 = arith.constant 0 : i32
    %c0_i32_1 = arith.constant 0 : i32
    return %c0_i32, %c0_i32_0 : i32, i32
  }
  func.func @transform_5(%arg0: i32) -> (i32, i32) {
    %c0_i32 = arith.constant 0 : i32
    %c0_i32_0 = arith.constant 0 : i32
    %c0_i32_1 = arith.constant 0 : i32
    return %c0_i32, %c0_i32_0 : i32, i32
  }
  func.func @transform_6(%arg0: i32) -> (i32, i32) {
    %c0_i32 = arith.constant 0 : i32
    %c0_i32_0 = arith.constant 0 : i32
    %c0_i32_1 = arith.constant 0 : i32
    return %c0_i32, %c0_i32_0 : i32, i32
  }
  func.func @transform_7(%arg0: i32) -> (i32, i32) {
    %c0_i32 = arith.constant 0 : i32
    %c0_i32_0 = arith.constant 0 : i32
    %c0_i32_1 = arith.constant 0 : i32
    return %c0_i32, %c0_i32_0 : i32, i32
  }
  func.func @transform_8(%arg0: i32) -> (i32, i32) {
    %c0_i32 = arith.constant 0 : i32
    %c0_i32_0 = arith.constant 0 : i32
    return %arg0, %c0_i32 : i32, i32
  }
}

</mosaic_0001>

<llo_original>
// kernel: sxrnet_linear2.1
$region0: #{sxrnet_linear2.1}
  #allocation0 [shape = 'u32[]', space=smem, size = 0x4, offset = 0x4, fixed_abs, tag = 'smem constant byte address 0x4 - core index']
  #allocation1 [shape = 'u32[72,128]{1,0:T(1,128)}', space=vmem, size = 0x9000, scoped, tag = 'internal scratch']
  %s0 = inlined_call_operand.vmem [shape: f32[3], index: 0, kind: input, shape index: {}]
  %s1 = inlined_call_operand.hbm [shape: f32[16,32], index: 1, kind: input, shape index: {}]
  %s2 = inlined_call_operand.hbm [shape: f32[32,64], index: 2, kind: input, shape index: {}]
  %s3 = inlined_call_operand.vmem [shape: f32[1,64], index: 3, kind: input, shape index: {}]
  %s4 = inlined_call_operand.hbm [shape: f32[64,64], index: 4, kind: input, shape index: {}]
  %s5 = inlined_call_operand.vmem [shape: f32[1,64], index: 5, kind: input, shape index: {}]
  %s6 = inlined_call_operand.hbm [shape: f32[64,256], index: 6, kind: input, shape index: {}]
  %s7 = inlined_call_operand.vmem [shape: f32[1,256], index: 7, kind: input, shape index: {}]
  %s8 = inlined_call_operand.vmem [shape: f32[16,256], index: 8, kind: output, shape index: {}]
  %s9 = sld [smem:[#allocation0]]
  $region85: #{sxrnet_linear2.1} parent=0
    _
  %s11 = ssub.s32 1, %s9
  %s12 = scalar_select 0, %s11, %s9
  $region1: #{sxrnet_linear2.1} parent=0
    #allocation2 [shape = 'u8[512]{0}', space=smem, size = 0x200, scoped, tag = 'input window, operand 0, single buffered']
    #allocation3 [shape = 's32[2]{0}', space=sflag, size = 0x8, scoped, tag = 'scoped memory for sxrnet_linear2.1']
    #allocation4 [shape = 's32[2]{0}', space=sflag, size = 0x8, scoped, tag = 'scoped memory for sxrnet_linear2.1']
    #allocation5 [shape = 'u8[8192]{0}', space=vmem, size = 0x2000, scoped, tag = 'input window, operand 1']
    #allocation6 [shape = 'u8[16384]{0}', space=vmem, size = 0x4000, scoped, tag = 'input window, operand 2, single buffered']
    #allocation7 [shape = 's32[1]{0}', space=sflag, size = 0x4, scoped, tag = 'scoped memory for sxrnet_linear2.1']
    #allocation8 [shape = 'u8[32768]{0}', space=vmem, size = 0x8000, scoped, tag = 'input window, operand 4, single buffered']
    #allocation9 [shape = 'u8[65536]{0}', space=vmem, size = 0x10000, scoped, tag = 'input window, operand 6, single buffered']
    #allocation10 [shape = 's32[1]{0}', space=sflag, size = 0x4, scoped, tag = 'scoped memory for sxrnet_linear2.1']
    %13 = vsyncpa [#allocation4], 0
    %14 = vsyncpa [#allocation3], 0
    %s15 = scalar_lea.sflag [#allocation3], 1
    %16 = vsyncpa %s15, 0
    %17 = vsyncpa [#allocation7], 0
    %18 = vsyncpa [#allocation10], 0
    loop: start=0, step=1, limit=4
    $region2: #{sxrnet_linear2.1} parent=1 // loop_pre_header
      _
    $region3: #{sxrnet_linear2.1} parent=1 // loop_header
      %s20 = sphi 0, %s24
      %p21 = scmp.ge.s32.totalorder %s20, 4
      %s28 = sphi 0, %s28
      %s30 = sphi 0, %s28
      %s31 = sphi 0, %s30
      %s45 = sphi 0, %s31
      %s51 = sphi 0, %s53
      %s54 = sphi 0, %s51
      %s55 = sphi 0, %s54
      %s71 = sphi 0, %s55
      %s75 = sphi 0, %s75
      %s77 = sphi 0, %s75
      %s78 = sphi 0, %s77
      %s92 = sphi 0, %s78
      %s96 = sphi 0, %s96
      %s98 = sphi 0, %s96
      %s99 = sphi 0, %s98
      %s113 = sphi 0, %s99
      %s117 = sphi 0, %s117
      %s119 = sphi 0, %s117
      %s120 = sphi 0, %s119
      %s134 = sphi 0, %s120
      %s138 = sphi 0, %s138
      %s140 = sphi 0, %s138
      %s141 = sphi 0, %s140
      %s155 = sphi 0, %s141
      %s159 = sphi 0, %s159
      %s161 = sphi 0, %s159
      %s162 = sphi 0, %s161
      %s176 = sphi 0, %s162
      %s180 = sphi 0, %s180
      %s182 = sphi 0, %s180
      %s183 = sphi 0, %s182
      %s197 = sphi 0, %s183
      %s203 = sphi 0, %s205
      %s206 = sphi 0, %s203
      %s207 = sphi 0, %s206
      %s223 = sphi 0, %s207
    $region4: #{sxrnet_linear2.1} parent=1 // loop_header_branch
      %23 = sbr.rel (%p21) target = $region8
    $region5: #{sxrnet_linear2.1} parent=1 // loop_body
      %s25 = ssub.s32 %s20, 1
      %s26 = ssub.s32 %s20, 2
      %s27 = sadd.s32 %s20, 1
      %s29 = sadd.s32 %s28, 1
      %p32 = scmp.eq.s32.totalorder %s20, 1
      %p33 = scmp.ne.s32.totalorder %s28, %s30
      %p34 = scmp.eq.s32.totalorder %s20, 0
      %p35 = por %p33, %p34
      %p36 = scmp.ne.s32.totalorder %s28, %s30
      %p37 = scmp.eq.s32.totalorder %s25, 1
      %p38 = por %p36, %p37
      %p39 = scmp.ne.s32.totalorder %s30, %s31
      %p40 = scmp.eq.s32.totalorder %s25, 0
      %p41 = por %p39, %p40
      %p42 = scmp.ne.s32.totalorder %s30, %s31
      %p43 = scmp.eq.s32.totalorder %s26, 1
      %p44 = por %p42, %p43
      %p46 = scmp.ne.s32.totalorder %s31, %s45
      %p47 = scmp.eq.s32.totalorder %s26, 0
      %p48 = por %p46, %p47
      %s49 = ssub.s32 %s20, %s27
      %p50 = scmp.eq.s32.totalorder %s49, 0
      %s52 = sadd.s32 %s51, 1
      %s53 = scalar_select %p50, %s51, %s52
      %p56 = pneg %p50
      %p57 = scmp.eq.s32.totalorder %s20, 1
      %p58 = por %p56, %p57
      %p59 = scmp.ne.s32.totalorder %s51, %s54
      %p60 = scmp.eq.s32.totalorder %s20, 0
      %p61 = por %p59, %p60
      %p62 = scmp.ne.s32.totalorder %s51, %s54
      %p63 = scmp.eq.s32.totalorder %s25, 1
      %p64 = por %p62, %p63
      %p65 = scmp.ne.s32.totalorder %s54, %s55
      %p66 = scmp.eq.s32.totalorder %s25, 0
      %p67 = por %p65, %p66
      %p68 = scmp.ne.s32.totalorder %s54, %s55
      %p69 = scmp.eq.s32.totalorder %s26, 1
      %p70 = por %p68, %p69
      %p72 = scmp.ne.s32.totalorder %s55, %s71
      %p73 = scmp.eq.s32.totalorder %s26, 0
      %p74 = por %p72, %p73
      %s76 = sadd.s32 %s75, 1
      %p79 = scmp.eq.s32.totalorder %s20, 1
      %p80 = scmp.ne.s32.totalorder %s75, %s77
      %p81 = scmp.eq.s32.totalorder %s20, 0
      %p82 = por %p80, %p81
      %p83 = scmp.ne.s32.totalorder %s75, %s77
      %p84 = scmp.eq.s32.totalorder %s25, 1
      %p85 = por %p83, %p84
      %p86 = scmp.ne.s32.totalorder %s77, %s78
      %p87 = scmp.eq.s32.totalorder %s25, 0
      %p88 = por %p86, %p87
      %p89 = scmp.ne.s32.totalorder %s77, %s78
      %p90 = scmp.eq.s32.totalorder %s26, 1
      %p91 = por %p89, %p90
      %p93 = scmp.ne.s32.totalorder %s78, %s92
      %p94 = scmp.eq.s32.totalorder %s26, 0
      %p95 = por %p93, %p94
      %s97 = sadd.s32 %s96, 1
      %p100 = scmp.eq.s32.totalorder %s20, 1
      %p101 = scmp.ne.s32.totalorder %s96, %s98
      %p102 = scmp.eq.s32.totalorder %s20, 0
      %p103 = por %p101, %p102
      %p104 = scmp.ne.s32.totalorder %s96, %s98
      %p105 = scmp.eq.s32.totalorder %s25, 1
      %p106 = por %p104, %p105
      %p107 = scmp.ne.s32.totalorder %s98, %s99
      %p108 = scmp.eq.s32.totalorder %s25, 0
      %p109 = por %p107, %p108
      %p110 = scmp.ne.s32.totalorder %s98, %s99
      %p111 = scmp.eq.s32.totalorder %s26, 1
      %p112 = por %p110, %p111
      %p114 = scmp.ne.s32.totalorder %s99, %s113
      %p115 = scmp.eq.s32.totalorder %s26, 0
      %p116 = por %p114, %p115
      %s118 = sadd.s32 %s117, 1
      %p121 = scmp.eq.s32.totalorder %s20, 1
      %p122 = scmp.ne.s32.totalorder %s117, %s119
      %p123 = scmp.eq.s32.totalorder %s20, 0
      %p124 = por %p122, %p123
      %p125 = scmp.ne.s32.totalorder %s117, %s119
      %p126 = scmp.eq.s32.totalorder %s25, 1
      %p127 = por %p125, %p126
      %p128 = scmp.ne.s32.totalorder %s119, %s120
      %p129 = scmp.eq.s32.totalorder %s25, 0
      %p130 = por %p128, %p129
      %p131 = scmp.ne.s32.totalorder %s119, %s120
      %p132 = scmp.eq.s32.totalorder %s26, 1
      %p133 = por %p131, %p132
      %p135 = scmp.ne.s32.totalorder %s120, %s134
      %p136 = scmp.eq.s32.totalorder %s26, 0
      %p137 = por %p135, %p136
      %s139 = sadd.s32 %s138, 1
      %p142 = scmp.eq.s32.totalorder %s20, 1
      %p143 = scmp.ne.s32.totalorder %s138, %s140
      %p144 = scmp.eq.s32.totalorder %s20, 0
      %p145 = por %p143, %p144
      %p146 = scmp.ne.s32.totalorder %s138, %s140
      %p147 = scmp.eq.s32.totalorder %s25, 1
      %p148 = por %p146, %p147
      %p149 = scmp.ne.s32.totalorder %s140, %s141
      %p150 = scmp.eq.s32.totalorder %s25, 0
      %p151 = por %p149, %p150
      %p152 = scmp.ne.s32.totalorder %s140, %s141
      %p153 = scmp.eq.s32.totalorder %s26, 1
      %p154 = por %p152, %p153
      %p156 = scmp.ne.s32.totalorder %s141, %s155
      %p157 = scmp.eq.s32.totalorder %s26, 0
      %p158 = por %p156, %p157
      %s160 = sadd.s32 %s159, 1
      %p163 = scmp.eq.s32.totalorder %s20, 1
      %p164 = scmp.ne.s32.totalorder %s159, %s161
      %p165 = scmp.eq.s32.totalorder %s20, 0
      %p166 = por %p164, %p165
      %p167 = scmp.ne.s32.totalorder %s159, %s161
      %p168 = scmp.eq.s32.totalorder %s25, 1
      %p169 = por %p167, %p168
      %p170 = scmp.ne.s32.totalorder %s161, %s162
      %p171 = scmp.eq.s32.totalorder %s25, 0
      %p172 = por %p170, %p171
      %p173 = scmp.ne.s32.totalorder %s161, %s162
      %p174 = scmp.eq.s32.totalorder %s26, 1
      %p175 = por %p173, %p174
      %p177 = scmp.ne.s32.totalorder %s162, %s176
      %p178 = scmp.eq.s32.totalorder %s26, 0
      %p179 = por %p177, %p178
      %s181 = sadd.s32 %s180, 1
      %p184 = scmp.eq.s32.totalorder %s20, 1
      %p185 = scmp.ne.s32.totalorder %s180, %s182
      %p186 = scmp.eq.s32.totalorder %s20, 0
      %p187 = por %p185, %p186
      %p188 = scmp.ne.s32.totalorder %s180, %s182
      %p189 = scmp.eq.s32.totalorder %s25, 1
      %p190 = por %p188, %p189
      %p191 = scmp.ne.s32.totalorder %s182, %s183
      %p192 = scmp.eq.s32.totalorder %s25, 0
      %p193 = por %p191, %p192
      %p194 = scmp.ne.s32.totalorder %s182, %s183
      %p195 = scmp.eq.s32.totalorder %s26, 1
      %p196 = por %p194, %p195
      %p198 = scmp.ne.s32.totalorder %s183, %s197
      %p199 = scmp.eq.s32.totalorder %s26, 0
      %p200 = por %p198, %p199
      %s201 = ssub.s32 %s20, %s27
      %p202 = scmp.eq.s32.totalorder %s201, 0
      %s204 = sadd.s32 %s203, 1
      %s205 = scalar_select %p202, %s203, %s204
      %p208 = pneg %p202
      %p209 = scmp.eq.s32.totalorder %s20, 1
      %p210 = por %p208, %p209
      %p211 = scmp.ne.s32.totalorder %s203, %s206
      %p212 = scmp.eq.s32.totalorder %s20, 0
      %p213 = por %p211, %p212
      %p214 = scmp.ne.s32.totalorder %s203, %s206
      %p215 = scmp.eq.s32.totalorder %s25, 1
      %p216 = por %p214, %p215
      %p217 = scmp.ne.s32.totalorder %s206, %s207
      %p218 = scmp.eq.s32.totalorder %s25, 0
      %p219 = por %p217, %p218
      %p220 = scmp.ne.s32.totalorder %s206, %s207
      %p221 = scmp.eq.s32.totalorder %s26, 1
      %p222 = por %p220, %p221
      %p224 = scmp.ne.s32.totalorder %s207, %s223
      %p225 = scmp.eq.s32.totalorder %s26, 0
      %p226 = por %p224, %p225
      %p227 = scmp.le.s32.totalorder 1, %s20
      %p228 = scmp.lt.s32.totalorder %s20, 3
      %p229 = pnand %p227, %p228
      %p230 = pneg %p229
      // Predicated region
      $region9: #{sxrnet_linear2.1} parent=5 // pred_check
        _
      $region10: #{sxrnet_linear2.1} parent=5 // pred_check_branch
        %232 = sbr.rel (%p229) target = $region12
      $region11: #{sxrnet_linear2.1} parent=5 // pred_region
        %s233 = ssub.s32 %s20, 1
        // Predicated region
        $region13: #{sxrnet_linear2.1} parent=11 // pred_check
          %p234 = pneg %p41
        $region14: #{sxrnet_linear2.1} parent=11 // pred_check_branch
          %236 = sbr.rel (%p234) target = $region16
        $region15: #{sxrnet_linear2.1} parent=11 // pred_region
          %238 = vsyncadd [#allocation4], 0
          %s240 = sshll.u32 %s0, 4
          %s241 = int_to_ptr.vmem [resolvable:$true] %s240
          %243 = dma.vmem_to_smem %s241, 16, [#allocation2], [#allocation4]
        $region16: #{sxrnet_linear2.1} parent=11 // pred_fallthru
          _
        // Predicated region
        $region17: #{sxrnet_linear2.1} parent=11 // pred_check
          %p244 = pneg %p88
        $region18: #{sxrnet_linear2.1} parent=11 // pred_check_branch
          %246 = sbr.rel (%p244) target = $region20
        $region19: #{sxrnet_linear2.1} parent=11 // pred_region
          %248 = vsyncadd [#allocation7], 0
          %s249 = sshll.u32 %s2, 4
          %s250 = int_to_ptr.hbm [resolvable:$true] %s249
          %s251 = sshll.u32 [#allocation6], 4
          %s252 = int_to_ptr.vmem [resolvable:$true] %s251
          %257 = dma.hbm_to_vmem [thread:$0]  %s250, 512, %s252, [#allocation7], 128, 128, 8
        $region20: #{sxrnet_linear2.1} parent=11 // pred_fallthru
          _
        // Predicated region
        $region21: #{sxrnet_linear2.1} parent=11 // pred_check
          %p258 = pneg %p109
        $region22: #{sxrnet_linear2.1} parent=11 // pred_check_branch
          %260 = sbr.rel (%p258) target = $region24
        $region23: #{sxrnet_linear2.1} parent=11 // pred_region
          _
        $region24: #{sxrnet_linear2.1} parent=11 // pred_fallthru
          _
        // Predicated region
        $region25: #{sxrnet_linear2.1} parent=11 // pred_check
          %p261 = pneg %p130
        $region26: #{sxrnet_linear2.1} parent=11 // pred_check_branch
          %263 = sbr.rel (%p261) target = $region28
        $region27: #{sxrnet_linear2.1} parent=11 // pred_region
          %265 = vsyncadd [#allocation7], 0
          %s266 = sshll.u32 %s4, 4
          %s267 = int_to_ptr.hbm [resolvable:$true] %s266
          %s268 = sshll.u32 [#allocation8], 4
          %s269 = int_to_ptr.vmem [resolvable:$true] %s268
          %274 = dma.hbm_to_vmem [thread:$0]  %s267, 1024, %s269, [#allocation7], 128, 128, 8
        $region28: #{sxrnet_linear2.1} parent=11 // pred_fallthru
          _
        // Predicated region
        $region29: #{sxrnet_linear2.1} parent=11 // pred_check
          %p275 = pneg %p151
        $region30: #{sxrnet_linear2.1} parent=11 // pred_check_branch
          %277 = sbr.rel (%p275) target = $region32
        $region31: #{sxrnet_linear2.1} parent=11 // pred_region
          _
        $region32: #{sxrnet_linear2.1} parent=11 // pred_fallthru
          _
        // Predicated region
        $region33: #{sxrnet_linear2.1} parent=11 // pred_check
          %p278 = pneg %p172
        $region34: #{sxrnet_linear2.1} parent=11 // pred_check_branch
          %280 = sbr.rel (%p278) target = $region36
        $region35: #{sxrnet_linear2.1} parent=11 // pred_region
          %282 = vsyncadd [#allocation10], 0
          %s283 = sshll.u32 %s6, 4
          %s284 = int_to_ptr.hbm [resolvable:$true] %s283
          %s285 = sshll.u32 [#allocation9], 4
          %s286 = int_to_ptr.vmem [resolvable:$true] %s285
          %291 = dma.hbm_to_vmem [thread:$0]  %s284, 2048, %s286, [#allocation10], 256, 256, 16
        $region36: #{sxrnet_linear2.1} parent=11 // pred_fallthru
          _
        // Predicated region
        $region37: #{sxrnet_linear2.1} parent=11 // pred_check
          %p292 = pneg %p193
        $region38: #{sxrnet_linear2.1} parent=11 // pred_check_branch
          %294 = sbr.rel (%p292) target = $region40
        $region39: #{sxrnet_linear2.1} parent=11 // pred_region
          _
        $region40: #{sxrnet_linear2.1} parent=11 // pred_fallthru
          _
      $region12: #{sxrnet_linear2.1} parent=5 // pred_fallthru
        _
      %p295 = scmp.lt.s32.totalorder %s20, 2
      // Predicated region
      $region41: #{sxrnet_linear2.1} parent=5 // pred_check
        %p296 = pneg %p295
      $region42: #{sxrnet_linear2.1} parent=5 // pred_check_branch
        %298 = sbr.rel (%p296) target = $region44
      $region43: #{sxrnet_linear2.1} parent=5 // pred_region
        // Predicated region
        $region45: #{sxrnet_linear2.1} parent=43 // pred_check
          %p299 = pneg %p61
        $region46: #{sxrnet_linear2.1} parent=43 // pred_check_branch
          %301 = sbr.rel (%p299) target = $region48
        $region47: #{sxrnet_linear2.1} parent=43 // pred_region
          %s302 = sand.u32 %s51, 1
          %s303 = scalar_lea.sflag [#allocation3], %s302
          %s304 = sand.u32 %s51, 1
          %s305 = smul.addr %s304, 8
          %s306 = scalar_lea.vmem [#allocation5], %s305
          %308 = vsyncadd %s303, 0
          %s309 = smul.addr %s20, 8
          %s310 = scalar_lea.hbm %s1, %s309
          %s312 = sshll.u32 %s310, 4
          %s313 = int_to_ptr.hbm [resolvable:$true] %s312
          %s314 = sshll.u32 %s306, 4
          %s315 = int_to_ptr.vmem [resolvable:$true] %s314
          %317 = dma.hbm_to_vmem [thread:$0]  %s313, 128, %s315, %s303
        $region48: #{sxrnet_linear2.1} parent=43 // pred_fallthru
          _
      $region44: #{sxrnet_linear2.1} parent=5 // pred_fallthru
        _
      %p318 = scmp.le.s32.totalorder 1, %s20
      %p319 = scmp.lt.s32.totalorder %s20, 3
      %p320 = pnand %p318, %p319
      %p321 = pneg %p320
      // Predicated region
      $region49: #{sxrnet_linear2.1} parent=5 // pred_check
        _
      $region50: #{sxrnet_linear2.1} parent=5 // pred_check_branch
        %323 = sbr.rel (%p320) target = $region52
      $region51: #{sxrnet_linear2.1} parent=5 // pred_region
        %s324 = ssub.s32 %s20, 1
        // Predicated region
        $region53: #{sxrnet_linear2.1} parent=51 // pred_check
          %p325 = pneg %p41
        $region54: #{sxrnet_linear2.1} parent=51 // pred_check_branch
          %327 = sbr.rel (%p325) target = $region56
        $region55: #{sxrnet_linear2.1} parent=51 // pred_region
          %329 = dma.done [#allocation4], 16
        $region56: #{sxrnet_linear2.1} parent=51 // pred_fallthru
          _
        %s330 = sand.u32 %s54, 1
        %s331 = scalar_lea.sflag [#allocation3], %s330
        %s332 = sand.u32 %s54, 1
        %s333 = smul.addr %s332, 8
        %s334 = scalar_lea.vmem [#allocation5], %s333
        // Predicated region
        $region57: #{sxrnet_linear2.1} parent=51 // pred_check
          %p335 = pneg %p67
        $region58: #{sxrnet_linear2.1} parent=51 // pred_check_branch
          %337 = sbr.rel (%p335) target = $region60
        $region59: #{sxrnet_linear2.1} parent=51 // pred_region
          %339 = dma.done %s331, 128
        $region60: #{sxrnet_linear2.1} parent=51 // pred_fallthru
          _
        // Predicated region
        $region61: #{sxrnet_linear2.1} parent=51 // pred_check
          %p340 = pneg %p88
        $region62: #{sxrnet_linear2.1} parent=51 // pred_check_branch
          %342 = sbr.rel (%p340) target = $region64
        $region63: #{sxrnet_linear2.1} parent=51 // pred_region
          %344 = dma.done [#allocation7], 512
        $region64: #{sxrnet_linear2.1} parent=51 // pred_fallthru
          _
        // Predicated region
        $region65: #{sxrnet_linear2.1} parent=51 // pred_check
          %p345 = pneg %p130
        $region66: #{sxrnet_linear2.1} parent=51 // pred_check_branch
          %347 = sbr.rel (%p345) target = $region68
        $region67: #{sxrnet_linear2.1} parent=51 // pred_region
          %349 = dma.done [#allocation7], 1024
        $region68: #{sxrnet_linear2.1} parent=51 // pred_fallthru
          _
        // Predicated region
        $region69: #{sxrnet_linear2.1} parent=51 // pred_check
          %p350 = pneg %p172
        $region70: #{sxrnet_linear2.1} parent=51 // pred_check_branch
          %352 = sbr.rel (%p350) target = $region72
        $region71: #{sxrnet_linear2.1} parent=51 // pred_region
          %354 = dma.done [#allocation10], 2048
        $region72: #{sxrnet_linear2.1} parent=51 // pred_fallthru
          _
        %355 = sfence
        %p356 = pneg %p41
        %p357 = pneg %p38
        %s358 = sand.u32 %s54, 1
        %s359 = scalar_lea.sflag [#allocation3], %s358
        %s360 = sand.u32 %s54, 1
        %s361 = smul.addr %s360, 8
        %s362 = scalar_lea.vmem [#allocation5], %s361
        %p363 = pneg %p67
        %p364 = pneg %p64
        %p365 = pneg %p88
        %p366 = pneg %p85
        %p367 = pneg %p109
        %p368 = pneg %p106
        %p369 = pneg %p130
        %p370 = pneg %p127
        %p371 = pneg %p151
        %p372 = pneg %p148
        %p373 = pneg %p172
        %p374 = pneg %p169
        %p375 = pneg %p193
        %p376 = pneg %p190
        %p377 = pneg %p219
        %p378 = pneg %p216
        %p379 = scmp.lt.s32.totalorder %s25, 1
        %s380 = scalar_select %p379, %s25, 1
        %s381 = smul.addr %s380, 2
        %s382 = smul.addr %s381, 8
        %s383 = scalar_lea.vmem %s8, %s382
        %p384 = scmp.lt.s32.totalorder %s25, 1
        %s385 = scalar_select %p384, %s25, 1
        %s386 = smul.addr %s385, 2
        %s387 = smul.addr %s386, 8
        %s388 = scalar_lea.vmem %s8, %s387
        %v389 = vld [vmem:[%s334] sm:$0xff]
        %v390 = vld [vmem:[#allocation6] sm:$0xff]
        %v391 = vld [vmem:[#allocation6 + $0x8] sm:$0xff]
        %v392 = vld [vmem:[#allocation6 + $0x10] sm:$0xff]
        %v393 = vld [vmem:[#allocation6 + $0x18] sm:$0xff]
        %v394 = vld [vmem:[%s3] sm:$0x1]
        %v396 = vperm.slane %v394, 0
        %vm398 = vcmask 261120
        %v400 = vsel %vm398, %v389, 0
        %402 = vmatpush.msra.mxu0 0.0
        %403 = vmatpush.msra.mxu0 0.0
        %404 = vmatpush.msra.mxu0 0.0
        %405 = vmatpush.msra.mxu0 0.0
        %406 = vmatpush.msra.mxu0 0.0
        %407 = vmatpush.msra.mxu0 0.0
        %408 = vmatpush.msra.mxu0 0.0
        %409 = vmatpush.msra.mxu0 0.0
        %410 = vmatpush.msra.mxu0 0.0
        %411 = vmatpush.msra.mxu0 0.0
        %412 = vmatpush.msra.mxu0 0.0
        %413 = vmatpush.msra.mxu0 0.0
        %414 = vmatpush.msra.mxu0 %v393
        %415 = vmatpush.msra.mxu0 %v392
        %416 = vmatpush.msra.mxu0 %v391
        %417 = vmatpush.msra.mxu0 %v390
        %418 = vmatmul.f32.gmra.mxu0 %v400
        %v419 = vpop.f32.mrf.mxu0
        %v420 = vadd.f32 %v396, %v419
        %421 = vdwg.mxu0
        %s422 = sld [smem:[#allocation2]]
        %s423 = ssub.f32 0.0, %s422
        %v424 = vstv %s423
        %v425 = vmul.f32 %v424, %v420
        %v426 = vmul.f32 %v425, 1.442695
        %v427 = vpow.pop %v426
        %v428 = vadd.f32 %v427, 1.0
        %v429 = vrcp.pop %v428
        %v430 = vmul.f32 %v420, %v429
        %v431 = vld [vmem:[#allocation8] sm:$0xff]
        %v432 = vld [vmem:[#allocation8 + $0x8] sm:$0xff]
        %v433 = vld [vmem:[#allocation8 + $0x10] sm:$0xff]
        %v434 = vld [vmem:[#allocation8 + $0x18] sm:$0xff]
        %v435 = vld [vmem:[#allocation8 + $0x20] sm:$0xff]
        %v436 = vld [vmem:[#allocation8 + $0x28] sm:$0xff]
        %v437 = vld [vmem:[#allocation8 + $0x30] sm:$0xff]
        %v438 = vld [vmem:[#allocation8 + $0x38] sm:$0xff]
        %v439 = vld [vmem:[%s5] sm:$0x1]
        %v441 = vperm.slane %v439, 0
        %vm443 = vcmask 523264
        %v445 = vsel %vm443, %v430, 0
        %447 = vmatpush.msra.mxu0 0.0
        %448 = vmatpush.msra.mxu0 0.0
        %449 = vmatpush.msra.mxu0 0.0
        %450 = vmatpush.msra.mxu0 0.0
        %451 = vmatpush.msra.mxu0 0.0
        %452 = vmatpush.msra.mxu0 0.0
        %453 = vmatpush.msra.mxu0 0.0
        %454 = vmatpush.msra.mxu0 0.0
        %455 = vmatpush.msra.mxu0 %v438
        %456 = vmatpush.msra.mxu0 %v437
        %457 = vmatpush.msra.mxu0 %v436
        %458 = vmatpush.msra.mxu0 %v435
        %459 = vmatpush.msra.mxu0 %v434
        %460 = vmatpush.msra.mxu0 %v433
        %461 = vmatpush.msra.mxu0 %v432
        %462 = vmatpush.msra.mxu0 %v431
        %463 = vmatmul.f32.gmra.mxu0 %v445
        %v464 = vpop.f32.mrf.mxu0
        %v465 = vadd.f32 %v441, %v464
        %466 = vdwg.mxu0
        %s467 = sld [smem:[#allocation2 + $0x1]]
        %s468 = ssub.f32 0.0, %s467
        %v469 = vstv %s468
        %v470 = vmul.f32 %v469, %v465
        %v471 = vmul.f32 %v470, 1.442695
        %v472 = vpow.pop %v471
        %v473 = vadd.f32 %v472, 1.0
        %v474 = vrcp.pop %v473
        %v475 = vmul.f32 %v465, %v474
        %v476 = vld [vmem:[#allocation9] sm:$0xff]
        %v477 = vld [vmem:[#allocation9 + $0x8] sm:$0xff]
        %v478 = vld [vmem:[#allocation9 + $0x10] sm:$0xff]
        %v479 = vld [vmem:[#allocation9 + $0x18] sm:$0xff]
        %v480 = vld [vmem:[#allocation9 + $0x20] sm:$0xff]
        %v481 = vld [vmem:[#allocation9 + $0x28] sm:$0xff]
        %v482 = vld [vmem:[#allocation9 + $0x30] sm:$0xff]
        %v483 = vld [vmem:[#allocation9 + $0x38] sm:$0xff]
        %v484 = vld [vmem:[#allocation9 + $0x40] sm:$0xff]
        %v485 = vld [vmem:[#allocation9 + $0x48] sm:$0xff]
        %v486 = vld [vmem:[#allocation9 + $0x50] sm:$0xff]
        %v487 = vld [vmem:[#allocation9 + $0x58] sm:$0xff]
        %v488 = vld [vmem:[#allocation9 + $0x60] sm:$0xff]
        %v489 = vld [vmem:[#allocation9 + $0x68] sm:$0xff]
        %v490 = vld [vmem:[#allocation9 + $0x70] sm:$0xff]
        %v491 = vld [vmem:[#allocation9 + $0x78] sm:$0xff]
        %v492 = vld [vmem:[%s7] sm:$0x3]
        %v494 = vperm.slane %v492, 0
        %v495 = vperm.slane %v492, 1
        %v499 = vsel %vm443, %v475, 0
        %501 = vmatpush.msra.mxu0 0.0
        %502 = vmatpush.msra.mxu0 0.0
        %503 = vmatpush.msra.mxu0 0.0
        %504 = vmatpush.msra.mxu0 0.0
        %505 = vmatpush.msra.mxu0 0.0
        %506 = vmatpush.msra.mxu0 0.0
        %507 = vmatpush.msra.mxu0 0.0
        %508 = vmatpush.msra.mxu0 0.0
        %509 = vmatpush.msra.mxu0 %v490
        %510 = vmatpush.msra.mxu0 %v488
        %511 = vmatpush.msra.mxu0 %v486
        %512 = vmatpush.msra.mxu0 %v484
        %513 = vmatpush.msra.mxu0 %v482
        %514 = vmatpush.msra.mxu0 %v480
        %515 = vmatpush.msra.mxu0 %v478
        %516 = vmatpush.msra.mxu0 %v476
        %517 = vmatmul.f32.gmra.mxu0 %v499
        %v518 = vpop.f32.mrf.mxu0
        %v519 = vadd.f32 %v494, %v518
        %520 = vdwg.mxu0
        %521 = vmatpush.msra.mxu0 0.0
        %522 = vmatpush.msra.mxu0 0.0
        %523 = vmatpush.msra.mxu0 0.0
        %524 = vmatpush.msra.mxu0 0.0
        %525 = vmatpush.msra.mxu0 0.0
        %526 = vmatpush.msra.mxu0 0.0
        %527 = vmatpush.msra.mxu0 0.0
        %528 = vmatpush.msra.mxu0 0.0
        %529 = vmatpush.msra.mxu0 %v491
        %530 = vmatpush.msra.mxu0 %v489
        %531 = vmatpush.msra.mxu0 %v487
        %532 = vmatpush.msra.mxu0 %v485
        %533 = vmatpush.msra.mxu0 %v483
        %534 = vmatpush.msra.mxu0 %v481
        %535 = vmatpush.msra.mxu0 %v479
        %536 = vmatpush.msra.mxu0 %v477
        %537 = vmatmul.f32.gmra.mxu0 %v499
        %v538 = vpop.f32.mrf.mxu0
        %v539 = vadd.f32 %v495, %v538
        %540 = vdwg.mxu0
        %s541 = sld [smem:[#allocation2 + $0x2]]
        %s542 = ssub.f32 0.0, %s541
        %v543 = vstv %s542
        %v544 = vmul.f32 %v543, %v519
        %v545 = vmul.f32 %v543, %v539
        %v546 = vmul.f32 %v544, 1.442695
        %v547 = vpow.pop %v546
        %v548 = vmul.f32 %v545, 1.442695
        %v549 = vpow.pop %v548
        %v550 = vadd.f32 %v547, 1.0
        %v551 = vadd.f32 %v549, 1.0
        %v552 = vrcp.pop %v550
        %v553 = vrcp.pop %v551
        %v554 = vmul.f32 %v519, %v552
        %v555 = vmul.f32 %v539, %v553
        %556 = vst [vmem:[%s388] sm:$0xff] %v554
        %557 = vst [vmem:[%s388 + $0x8] sm:$0xff] %v555
        %p558 = scmp.lt.s32.totalorder %s25, 1
        %s559 = scalar_select %p558, %s25, 1
        %s560 = smul.addr %s559, 2
        %s561 = smul.addr %s560, 8
        %s562 = scalar_lea.vmem %s8, %s561
        // Predicated region
        $region73: #{sxrnet_linear2.1} parent=51 // pred_check
          %p563 = pneg %p216
        $region74: #{sxrnet_linear2.1} parent=51 // pred_check_branch
          %565 = sbr.rel (%p563) target = $region76
        $region75: #{sxrnet_linear2.1} parent=51 // pred_region
          _
        $region76: #{sxrnet_linear2.1} parent=51 // pred_fallthru
          _
      $region52: #{sxrnet_linear2.1} parent=5 // pred_fallthru
        _
      %p566 = scmp.le.s32.totalorder 2, %s20
      // Predicated region
      $region77: #{sxrnet_linear2.1} parent=5 // pred_check
        %p567 = pneg %p566
      $region78: #{sxrnet_linear2.1} parent=5 // pred_check_branch
        %569 = sbr.rel (%p567) target = $region80
      $region79: #{sxrnet_linear2.1} parent=5 // pred_region
        %s570 = ssub.s32 %s20, 2
        // Predicated region
        $region81: #{sxrnet_linear2.1} parent=79 // pred_check
          %p571 = pneg %p222
        $region82: #{sxrnet_linear2.1} parent=79 // pred_check_branch
          %573 = sbr.rel (%p571) target = $region84
        $region83: #{sxrnet_linear2.1} parent=79 // pred_region
          %p574 = scmp.lt.s32.totalorder %s26, 1
          %s575 = scalar_select %p574, %s26, 1
          %s576 = smul.addr %s575, 2
          %s577 = smul.addr %s576, 8
          %s578 = scalar_lea.vmem %s8, %s577
        $region84: #{sxrnet_linear2.1} parent=79 // pred_fallthru
          _
      $region80: #{sxrnet_linear2.1} parent=5 // pred_fallthru
        _
    $region6: #{sxrnet_linear2.1} parent=1 // loop_footer
      %s24 = sadd.s32 1, %s20
    $region7: #{sxrnet_linear2.1} parent=1 // loop_footer_branch
      %19 = sbr.rel target = $region3
    $region8: #{sxrnet_linear2.1} parent=1 // loop_exit
      _
    %579 = vsyncpa [#allocation3], 1
    %s580 = scalar_lea.sflag [#allocation3], 1
    %581 = vsyncpa %s580, 1
    %582 = vsyncpa [#allocation7], 1
    %583 = vsyncpa [#allocation10], 1
    %584 = vsyncpa [#allocation4], 1
    %s585 = scalar_lea.sflag [#allocation4], 1
    %586 = vsyncpa %s585, 1

</llo_original>
